<compile_context>
chip_gen: v5e
topology: v5e:2x2
jax: 0.10.0
libtpu: 0.0.40
codegen_flags: <defaults>
</compile_context>

<pallas_src>
import functools

import jax
import jax.numpy as jnp
import numpy as np
from jax.experimental import pallas as pl
from jax.experimental.pallas import tpu as pltpu

_LANES = 128
_SUBLANES = 8


def _sentiment_kernel(ids_ref, emb_t_ref, w_ref, b_ref, out_ref):
    """Fused (embedding . fc[O-1]) lookup + sigmoid for the last tokens.

    ids_ref   : (1, B_pad)      int32  last-token ids, padded with -1
    emb_t_ref : (E_pad, V_pad)  f32    embedding table, transposed & padded
    w_ref     : (1, E_pad)      f32    last row of the fc weight
    b_ref     : (1,)            f32    fc_bias[O-1], in SMEM
    out_ref   : (1, B_pad)      f32    sigmoid(fused logits), lane-dense
    """
    # Fold the surviving fc row into the table: fused[v] = sum_e W[O-1,e]*emb[v,e].
    fused = jnp.dot(w_ref[...], emb_t_ref[...],
                    preferred_element_type=jnp.float32)            # (1, V_pad)

    # One-hot gather on the MXU: logits[b] = fused[ids[b]].
    # Padded ids are -1 and never match the iota, so padded lanes stay 0.
    v_pad = emb_t_ref.shape[1]
    b_pad = ids_ref.shape[1]
    v_iota = jax.lax.broadcasted_iota(jnp.int32, (v_pad, b_pad), 0)
    onehot = (v_iota == ids_ref[...]).astype(jnp.float32)          # (V_pad, B_pad)
    logits = jnp.dot(fused, onehot,
                     preferred_element_type=jnp.float32)           # (1, B_pad)

    out_ref[...] = jax.nn.sigmoid(logits + b_ref[0])


@functools.partial(jax.jit, static_argnames=())
def base_sentiment_forward(input_words, embedding_table, fc_weight, fc_bias):
    """input_words: (B, S) int; embedding_table: (V, E);
    fc_weight: (O, E) (PyTorch layout); fc_bias: (O,).  Returns (B,) float32."""
    B, S = input_words.shape
    V, E = embedding_table.shape
    O = fc_bias.shape[0]

    B_pad = _LANES * pl.cdiv(B, _LANES)
    V_pad = _LANES * pl.cdiv(V, _LANES)
    E_pad = _SUBLANES * pl.cdiv(E, _SUBLANES)

    # Only the last token of each sequence ever reaches the output.
    last_ids = input_words[:, -1].astype(jnp.int32)                        # (B,)
    ids_row = jnp.full((1, B_pad), -1, jnp.int32).at[0, :B].set(last_ids)  # pad -> never matches

    # Transposed + lane-padded embedding table so the fused row is lane-dense.
    emb_t = jnp.zeros((E_pad, V_pad), jnp.float32).at[:E, :V].set(
        embedding_table.astype(jnp.float32).T)

    # Only output channel O-1 survives x.view(B, -1)[:, -1].
    w_row = jnp.zeros((1, E_pad), jnp.float32).at[0, :E].set(
        fc_weight[O - 1].astype(jnp.float32))
    b_last = fc_bias[O - 1].reshape(1).astype(jnp.float32)

    out_row = pl.pallas_call(
        _sentiment_kernel,
        out_shape=jax.ShapeDtypeStruct((1, B_pad), jnp.float32),
        in_specs=[
            pl.BlockSpec((1, B_pad), lambda: (0, 0)),
            pl.BlockSpec((E_pad, V_pad), lambda: (0, 0)),
            pl.BlockSpec((1, E_pad), lambda: (0, 0)),
            pl.BlockSpec(memory_space=pltpu.MemorySpace.SMEM),
        ],
        out_specs=pl.BlockSpec((1, B_pad), lambda: (0, 0)),
    )(ids_row, emb_t, w_row, b_last)

    return out_row[0, :B]


if __name__ == "__main__":
    # Small shapes consistent with the forward pass:
    #   vocab_size=64, embedding_dim=128, output_size=4, batch=8, seq=16
    B, S = 8, 16
    VOCAB, EMB_DIM, OUT_SIZE = 64, 128, 4

    key = jax.random.PRNGKey(0)
    k_ids, k_emb, k_w, k_b = jax.random.split(key, 4)

    input_words = jax.random.randint(k_ids, (B, S), 0, VOCAB, dtype=jnp.int32)
    embedding_table = jax.random.normal(k_emb, (VOCAB, EMB_DIM), jnp.float32) * 0.1
    # id 0 maps to the zero vector, matching `embed_dictionary[0] = zeros(...)`.
    embedding_table = embedding_table.at[0].set(0.0)
    fc_weight = jax.random.normal(k_w, (OUT_SIZE, EMB_DIM), jnp.float32) * 0.05
    fc_bias = jax.random.normal(k_b, (OUT_SIZE,), jnp.float32) * 0.05

    out = base_sentiment_forward(input_words, embedding_table, fc_weight, fc_bias)
    out = jax.block_until_ready(out)

    # Pure-JAX reference for a sanity check (full un-pruned forward).
    emb_full = embedding_table[input_words]                      # (B, S, E)
    ref = jax.nn.sigmoid(emb_full @ fc_weight.T + fc_bias)       # (B, S, O)
    ref = ref.reshape(B, -1)[:, -1]
    np.testing.assert_allclose(np.asarray(out), np.asarray(ref), rtol=1e-5, atol=1e-5)

    print("KERNEL_OK")
</pallas_src>

<mosaic_0001>
module attributes {stable_mosaic.version = 11 : i64} {
  func.func @_sentiment_kernel(%arg0: memref<1x128xi32, #tpu.memory_space<vmem>>, %arg1: memref<128x128xf32, #tpu.memory_space<vmem>>, %arg2: memref<1x128xf32, #tpu.memory_space<vmem>>, %arg3: memref<1xf32, #tpu.memory_space<smem>>, %arg4: memref<1x128xf32, #tpu.memory_space<vmem>>) attributes {dimension_semantics = [], scalar_prefetch = 0 : i64, scratch_operands = 0 : i64, tpu.core_type = #tpu.core_type<tc>} {
    %c0 = arith.constant 0 : index
    %c0_0 = arith.constant 0 : index
    %0 = vector.load %arg2[%c0, %c0_0] : memref<1x128xf32, #tpu.memory_space<vmem>>, vector<1x128xf32>
    %c0_1 = arith.constant 0 : index
    %c0_2 = arith.constant 0 : index
    %1 = vector.load %arg1[%c0_1, %c0_2] : memref<128x128xf32, #tpu.memory_space<vmem>>, vector<128x128xf32>
    %cst = arith.constant dense<0.000000e+00> : vector<1x128xf32>
    %2 = tpu.matmul %0, %1, %cst {dimension_numbers = #tpu.dot_dimension_numbers<[1], [0], [0], [1], [0, 0, 1, 1], [], []>} : vector<1x128xf32>, vector<128x128xf32>, vector<1x128xf32> -> vector<1x128xf32>
    %3 = tpu.iota {dimensions = array<i32: 0>} : vector<128x128xi32>
    %c0_3 = arith.constant 0 : index
    %c0_4 = arith.constant 0 : index
    %4 = vector.load %arg0[%c0_3, %c0_4] : memref<1x128xi32, #tpu.memory_space<vmem>>, vector<1x128xi32>
    %5 = vector.broadcast %4 : vector<1x128xi32> to vector<128x128xi32>
    %6 = arith.cmpi eq, %3, %5 : vector<128x128xi32>
    %7 = arith.extui %6 : vector<128x128xi1> to vector<128x128xi32>
    %8 = arith.sitofp %7 : vector<128x128xi32> to vector<128x128xf32>
    %cst_5 = arith.constant dense<0.000000e+00> : vector<1x128xf32>
    %9 = tpu.matmul %2, %8, %cst_5 {dimension_numbers = #tpu.dot_dimension_numbers<[1], [0], [0], [1], [0, 0, 1, 1], [], []>} : vector<1x128xf32>, vector<128x128xf32>, vector<1x128xf32> -> vector<1x128xf32>
    %c0_6 = arith.constant 0 : index
    %10 = memref.load %arg3[%c0_6] : memref<1xf32, #tpu.memory_space<smem>>
    %11 = vector.broadcast %10 : f32 to vector<1x128xf32>
    %12 = arith.addf %9, %11 : vector<1x128xf32>
    %13 = arith.negf %12 : vector<1x128xf32>
    %14 = math.exp %13 : vector<1x128xf32>
    %cst_7 = arith.constant 1.000000e+00 : f32
    %15 = vector.broadcast %cst_7 : f32 to vector<1x128xf32>
    %16 = arith.addf %15, %14 : vector<1x128xf32>
    %17 = arith.divf %15, %16 : vector<1x128xf32>
    %c0_8 = arith.constant 0 : index
    %c0_9 = arith.constant 0 : index
    %18 = vector.load %arg4[%c0_8, %c0_9] : memref<1x128xf32, #tpu.memory_space<vmem>>, vector<1x128xf32>
    tpu.vector_store %arg4[%c0_8, %c0_9], %17 {strides = array<i32>} : memref<1x128xf32, #tpu.memory_space<vmem>>, vector<1x128xf32>,
    return
  }
}

</mosaic_0001>

<llo_original>
// kernel: base_sentiment_forward.1
$region0: #{base_sentiment_forward.1}
  #allocation0 [shape = 'u32[]', space=smem, size = 0x4, offset = 0x4, fixed_abs, tag = 'smem constant byte address 0x4 - core index']
  #allocation1 [shape = 'u32[72,128]{1,0:T(1,128)}', space=vmem, size = 0x9000, scoped, tag = 'internal scratch']
  #allocation2 [shape = 'f32[1]{0:T(128)S(6)}', space=smem, size = 0x200, scoped, tag = 'scoped memory for base_sentiment_forward.1']
  %s0 = inlined_call_operand.vmem [shape: s32[1,128], index: 0, kind: input, shape index: {}]
  %s1 = inlined_call_operand.vmem [shape: f32[128,128], index: 1, kind: input, shape index: {}]
  %s2 = inlined_call_operand.vmem [shape: f32[1,128], index: 2, kind: input, shape index: {}]
  %s3 = inlined_call_operand.<no memory space> [shape: f32[1], index: 3, kind: input, shape index: {}]
  %s4 = inlined_call_operand.vmem [shape: f32[1,128], index: 4, kind: output, shape index: {}]
  %s5 = sld [smem:[#allocation0]]
  $region26: #{base_sentiment_forward.1} parent=0
    _
  %s7 = ssub.s32 1, %s5
  %s8 = scalar_select 0, %s7, %s5
  %9 = sst [smem:[#allocation2]] %s3
  // Predicated region
  $region2: #{base_sentiment_forward.1} parent=0 // pred_check
    _
  $region3: #{base_sentiment_forward.1} parent=0 // pred_check_branch
    %11 = sbr.rel (0) target = $region5
  $region4: #{base_sentiment_forward.1} parent=0 // pred_region
    _
  $region5: #{base_sentiment_forward.1} parent=0 // pred_fallthru
    _
  // Predicated region
  $region6: #{base_sentiment_forward.1} parent=0 // pred_check
    _
  $region7: #{base_sentiment_forward.1} parent=0 // pred_check_branch
    %13 = sbr.rel (0) target = $region9
  $region8: #{base_sentiment_forward.1} parent=0 // pred_region
    _
  $region9: #{base_sentiment_forward.1} parent=0 // pred_fallthru
    _
  // Predicated region
  $region10: #{base_sentiment_forward.1} parent=0 // pred_check
    _
  $region11: #{base_sentiment_forward.1} parent=0 // pred_check_branch
    %15 = sbr.rel (0) target = $region13
  $region12: #{base_sentiment_forward.1} parent=0 // pred_region
    _
  $region13: #{base_sentiment_forward.1} parent=0 // pred_fallthru
    _
  // Predicated region
  $region14: #{base_sentiment_forward.1} parent=0 // pred_check
    _
  $region15: #{base_sentiment_forward.1} parent=0 // pred_check_branch
    %17 = sbr.rel (0) target = $region17
  $region16: #{base_sentiment_forward.1} parent=0 // pred_region
    _
  $region17: #{base_sentiment_forward.1} parent=0 // pred_fallthru
    _
  %v18 = vld [vmem:[%s2] sm:$0x1]
  %v19 = vld [vmem:[%s1] sm:$0xff]
  %v20 = vld [vmem:[%s1 + $0x8] sm:$0xff]
  %v21 = vld [vmem:[%s1 + $0x10] sm:$0xff]
  %v22 = vld [vmem:[%s1 + $0x18] sm:$0xff]
  %v23 = vld [vmem:[%s1 + $0x20] sm:$0xff]
  %v24 = vld [vmem:[%s1 + $0x28] sm:$0xff]
  %v25 = vld [vmem:[%s1 + $0x30] sm:$0xff]
  %v26 = vld [vmem:[%s1 + $0x38] sm:$0xff]
  %v27 = vld [vmem:[%s1 + $0x40] sm:$0xff]
  %v28 = vld [vmem:[%s1 + $0x48] sm:$0xff]
  %v29 = vld [vmem:[%s1 + $0x50] sm:$0xff]
  %v30 = vld [vmem:[%s1 + $0x58] sm:$0xff]
  %v31 = vld [vmem:[%s1 + $0x60] sm:$0xff]
  %v32 = vld [vmem:[%s1 + $0x68] sm:$0xff]
  %v33 = vld [vmem:[%s1 + $0x70] sm:$0xff]
  %v34 = vld [vmem:[%s1 + $0x78] sm:$0xff]
  %35 = vmatpush.msra.mxu0 %v34
  %36 = vmatpush.msra.mxu0 %v33
  %37 = vmatpush.msra.mxu0 %v32
  %38 = vmatpush.msra.mxu0 %v31
  %39 = vmatpush.msra.mxu0 %v30
  %40 = vmatpush.msra.mxu0 %v29
  %41 = vmatpush.msra.mxu0 %v28
  %42 = vmatpush.msra.mxu0 %v27
  %43 = vmatpush.msra.mxu0 %v26
  %44 = vmatpush.msra.mxu0 %v25
  %45 = vmatpush.msra.mxu0 %v24
  %46 = vmatpush.msra.mxu0 %v23
  %47 = vmatpush.msra.mxu0 %v22
  %48 = vmatpush.msra.mxu0 %v21
  %49 = vmatpush.msra.mxu0 %v20
  %50 = vmatpush.msra.mxu0 %v19
  %51 = vmatmul.f32.gmra.mxu0 %v18
  %v52 = vpop.f32.mrf.mxu0
  %v53 = vadd.f32 0.0, %v52
  %54 = vdwg.mxu0
  %v55 = vlaneseq
  %v56 = vshrl.u32 %v55, 7
  %v57 = vadd.s32 %v56, 8
  %v58 = vadd.s32 %v56, 16
  %v59 = vadd.s32 %v56, 24
  %v60 = vadd.s32 %v56, 32
  %v61 = vadd.s32 %v56, 40
  %v62 = vadd.s32 %v56, 48
  %v63 = vadd.s32 %v56, 56
  %v64 = vadd.s32 %v56, 64
  %v65 = vadd.s32 %v56, 72
  %v66 = vadd.s32 %v56, 80
  %v67 = vadd.s32 %v56, 88
  %v68 = vadd.s32 %v56, 96
  %v69 = vadd.s32 %v56, 104
  %v70 = vadd.s32 %v56, 112
  %v71 = vadd.s32 %v56, 120
  %v72 = vld [vmem:[%s0] sm:$0x1]
  %v73 = vperm.slane %v72, 0
  %vm74 = vcmp.eq.s32.totalorder %v56, %v73
  %vm75 = vcmp.eq.s32.totalorder %v57, %v73
  %vm76 = vcmp.eq.s32.totalorder %v58, %v73
  %vm77 = vcmp.eq.s32.totalorder %v59, %v73
  %vm78 = vcmp.eq.s32.totalorder %v60, %v73
  %vm79 = vcmp.eq.s32.totalorder %v61, %v73
  %vm80 = vcmp.eq.s32.totalorder %v62, %v73
  %vm81 = vcmp.eq.s32.totalorder %v63, %v73
  %vm82 = vcmp.eq.s32.totalorder %v64, %v73
  %vm83 = vcmp.eq.s32.totalorder %v65, %v73
  %vm84 = vcmp.eq.s32.totalorder %v66, %v73
  %vm85 = vcmp.eq.s32.totalorder %v67, %v73
  %vm86 = vcmp.eq.s32.totalorder %v68, %v73
  %vm87 = vcmp.eq.s32.totalorder %v69, %v73
  %vm88 = vcmp.eq.s32.totalorder %v70, %v73
  %vm89 = vcmp.eq.s32.totalorder %v71, %v73
  %v90 = vsel %vm74, 1, 0
  %v91 = vsel %vm75, 1, 0
  %v92 = vsel %vm76, 1, 0
  %v93 = vsel %vm77, 1, 0
  %v94 = vsel %vm78, 1, 0
  %v95 = vsel %vm79, 1, 0
  %v96 = vsel %vm80, 1, 0
  %v97 = vsel %vm81, 1, 0
  %v98 = vsel %vm82, 1, 0
  %v99 = vsel %vm83, 1, 0
  %v100 = vsel %vm84, 1, 0
  %v101 = vsel %vm85, 1, 0
  %v102 = vsel %vm86, 1, 0
  %v103 = vsel %vm87, 1, 0
  %v104 = vsel %vm88, 1, 0
  %v105 = vsel %vm89, 1, 0
  %v106 = vcvt.s32.f32 %v90
  %v107 = vcvt.s32.f32 %v91
  %v108 = vcvt.s32.f32 %v92
  %v109 = vcvt.s32.f32 %v93
  %v110 = vcvt.s32.f32 %v94
  %v111 = vcvt.s32.f32 %v95
  %v112 = vcvt.s32.f32 %v96
  %v113 = vcvt.s32.f32 %v97
  %v114 = vcvt.s32.f32 %v98
  %v115 = vcvt.s32.f32 %v99
  %v116 = vcvt.s32.f32 %v100
  %v117 = vcvt.s32.f32 %v101
  %v118 = vcvt.s32.f32 %v102
  %v119 = vcvt.s32.f32 %v103
  %v120 = vcvt.s32.f32 %v104
  %v121 = vcvt.s32.f32 %v105
  %s122 = sld [smem:[#allocation2]]
  %v123 = vstv %s122
  %124 = vmatpush.msra.mxu0 %v121
  %125 = vmatpush.msra.mxu0 %v120
  %126 = vmatpush.msra.mxu0 %v119
  %127 = vmatpush.msra.mxu0 %v118
  %128 = vmatpush.msra.mxu0 %v117
  %129 = vmatpush.msra.mxu0 %v116
  %130 = vmatpush.msra.mxu0 %v115
  %131 = vmatpush.msra.mxu0 %v114
  %132 = vmatpush.msra.mxu0 %v113
  %133 = vmatpush.msra.mxu0 %v112
  %134 = vmatpush.msra.mxu0 %v111
  %135 = vmatpush.msra.mxu0 %v110
  %136 = vmatpush.msra.mxu0 %v109
  %137 = vmatpush.msra.mxu0 %v108
  %138 = vmatpush.msra.mxu0 %v107
  %139 = vmatpush.msra.mxu0 %v106
  %140 = vmatmul.f32.gmra.mxu0 %v53
  %v141 = vpop.f32.mrf.mxu0
  %v142 = vadd.f32 %v123, %v141
  %143 = vdwg.mxu0
  %v144 = vxor.u32 %v142, 2147483648
  %v145 = vmul.f32 %v144, 1.442695
  %v146 = vpow.pop %v145
  %v147 = vadd.f32 %v146, 1.0
  %v148 = vrcp.pop %v147
  %v149 = vmul.f32 %v147, %v148
  %v150 = vsub.f32 1.0, %v149
  %v151 = vmul.f32 %v148, %v150
  %v152 = vadd.f32 %v148, %v151
  %vm153 = vweird.f32 %v147
  %vm154 = vweird.f32 %v148
  %vm155 = vmor %vm153, %vm154
  %v156 = vsel %vm155, %v148, %v152
  %v157 = vand.u32 2147483647, %v147
  %vm158 = vcmp.eq.f32.partialorder %v157, 8.507059e+37
  %v159 = vand.u32 %v147, 2147483648
  %v160 = vor.u32 1.1754944e-38, %v159
  %v161 = vsel %vm158, %v160, %v156
  %v162 = vmul.f32 1.0, %v161
  %163 = vst [vmem:[%s4] sm:$0x1] %v162
  // Predicated region
  $region18: #{base_sentiment_forward.1} parent=0 // pred_check
    _
  $region19: #{base_sentiment_forward.1} parent=0 // pred_check_branch
    %165 = sbr.rel (0) target = $region21
  $region20: #{base_sentiment_forward.1} parent=0 // pred_region
    _
  $region21: #{base_sentiment_forward.1} parent=0 // pred_fallthru
    _
  // Predicated region
  $region22: #{base_sentiment_forward.1} parent=0 // pred_check
    _
  $region23: #{base_sentiment_forward.1} parent=0 // pred_check_branch
    %167 = sbr.rel (0) target = $region25
  $region24: #{base_sentiment_forward.1} parent=0 // pred_region
    _
  $region25: #{base_sentiment_forward.1} parent=0 // pred_fallthru
    _

</llo_original>
